<compile_context>
chip_gen: v7x
topology: tpu7x:2x2x1
jax: 0.10.0
libtpu: 0.0.40
codegen_flags: <defaults>
</compile_context>

<pallas_src>
import functools

import jax
import jax.numpy as jnp
from jax.experimental import pallas as pl
from jax.experimental.pallas import tpu as pltpu


def _round_up(x, m):
    return ((x + m - 1) // m) * m


def _vmem_capacity_bytes():
    # Generation-aware VMEM capacity (v5e/v6e: 128 MiB, v7x: 64 MiB per TensorCore).
    # This is only an info query; on failure fall back to the most conservative (v7x) figure.
    try:
        info = pltpu.get_tpu_info()
        cap = getattr(info, "vmem_capacity_bytes", None)
        if cap:
            return int(cap)
    except Exception:  # info query only -- never masks kernel compile/runtime errors
        pass
    return 64 << 20


def _mlp_kernel(x_ref, w1_ref, b1_ref, w2_ref, b2_ref, o_ref, *, approximate):
    # fc1: MXU matmul with f32 accumulation.
    h32 = jnp.dot(x_ref[...], w1_ref[...], preferred_element_type=jnp.float32)
    # Bias + GELU in the parameter dtype (bf16 on the throughput path); tanh GELU -> EUP.
    h = h32.astype(b1_ref.dtype) + b1_ref[...]
    h = jax.nn.gelu(h, approximate=approximate)
    # dropout with p=0.0 is identity.
    # TODO(synk): stochastic dropout (p>0, training mode) not implemented; module default drop=0.0.
    out = jnp.dot(h.astype(w2_ref.dtype), w2_ref[...], preferred_element_type=jnp.float32)
    o_ref[...] = (out + b2_ref[...].astype(jnp.float32)).astype(o_ref.dtype)


def _mlp_kernel_htiled(x_ref, w1_ref, b1_ref, w2_ref, b2_ref, o_ref, acc_ref, *, approximate):
    # Hidden-dim-tiled variant: grid = (row tiles, H tiles); accumulate fc2 partial products in f32.
    k = pl.program_id(1)

    @pl.when(k == 0)
    def _():
        acc_ref[...] = jnp.zeros_like(acc_ref)

    h32 = jnp.dot(x_ref[...], w1_ref[...], preferred_element_type=jnp.float32)
    h = h32.astype(b1_ref.dtype) + b1_ref[...]
    h = jax.nn.gelu(h, approximate=approximate)  # elementwise -> valid per hidden tile
    acc_ref[...] += jnp.dot(h.astype(w2_ref.dtype), w2_ref[...],
                            preferred_element_type=jnp.float32)

    @pl.when(k == pl.num_programs(1) - 1)
    def _():
        o_ref[...] = (acc_ref[...] + b2_ref[...].astype(jnp.float32)).astype(o_ref.dtype)


def prepare_mlp_params(w1, b1, w2, b2, *, compute_dtype=jnp.bfloat16):
    """One-time parameter preparation (cast + lane-dense pad). Call at setup, not per step."""
    d_in, h = w1.shape
    h2, d_out = w2.shape
    assert h == h2 and b1.shape == (h,) and b2.shape == (d_out,)
    if compute_dtype is not None:
        w1 = w1.astype(compute_dtype)
        b1 = b1.astype(compute_dtype)
        w2 = w2.astype(compute_dtype)
        b2 = b2.astype(compute_dtype)
    d_out_p = _round_up(d_out, 128)  # lane-dense output -> unmasked vector stores
    if d_out_p != d_out:
        w2 = jnp.pad(w2, ((0, 0), (0, d_out_p - d_out)))
        b2 = jnp.pad(b2, (0, d_out_p - d_out))
    return {
        "w1": w1, "b1": b1.reshape(1, h),
        "w2": w2, "b2": b2.reshape(1, d_out_p),
        "d_out": d_out,
    }


def mlp_pallas(x, params, *, tm=256, th=None, gelu_approximate=True):
    """x: (B, N, D_in) -> (B, N, D_out).  `params` comes from prepare_mlp_params().

    tm: row tile (MXU wants 128/256; auto-shrunk to a /32 multiple for tiny inputs,
        auto-raised toward 512 in the hidden-tiled path).
    th: hidden-dim tile (None = auto; H is only tiled when resident weights would blow VMEM).
    gelu_approximate: True -> tanh GELU (EUP, fast); False -> exact erf GELU (torch default).
    """
    w1, b1, w2, b2 = params["w1"], params["b1"], params["w2"], params["b2"]
    D_out = params["d_out"]
    B, N, D_in = x.shape
    assert w1.shape[0] == D_in
    H = w1.shape[1]
    D_out_p = w2.shape[1]
    M = B * N
    out_dtype = x.dtype

    esz = jnp.dtype(w1.dtype).itemsize
    out_esz = jnp.dtype(out_dtype).itemsize

    vmem_cap = _vmem_capacity_bytes()
    resident_budget = (vmem_cap * 3) // 4        # threshold for keeping weights resident
    vmem_limit_cap = int(vmem_cap * 0.85)        # headroom for compiler internal scratch/semaphores

    def est_bytes(tm_, th_):
        return (2 * tm_ * D_in * esz                       # x tiles (double-buffered)
                + 2 * tm_ * D_out_p * out_esz              # output tiles (double-buffered)
                + 2 * (D_in * th_ + th_) * esz             # w1 + b1 (constant index -> fetched once)
                + 2 * (th_ * D_out_p + D_out_p) * esz      # w2 + b2
                + tm_ * th_ * 4                            # fc1 f32 activation slab
                + tm_ * D_out_p * 4)                       # fc2 f32 result / accumulator

    def shrink_th(tm_):
        t = H
        while est_bytes(tm_, t) > resident_budget and t % 2 == 0 and (t // 2) % 128 == 0:
            t //= 2
        return t

    tm_cap = _round_up(M, 32)
    tm_res = max(32, min(_round_up(tm, 32), tm_cap))

    th_eff = shrink_th(tm_res) if th is None else th
    assert H % th_eff == 0 and (th_eff == H or th_eff % 128 == 0), "invalid hidden tile"
    use_htile = th_eff < H

    if use_htile:
        # Weights are re-streamed once per row tile here; bigger row tiles cut that HBM traffic.
        tm_eff = max(32, min(_round_up(max(tm, 512), 32), tm_cap))
        if th is None:
            th_eff = shrink_th(tm_eff)
            use_htile = th_eff < H
            if not use_htile:
                tm_eff = tm_res
    else:
        tm_eff = tm_res

    if not use_htile:
        # v7x megacore: give the single parallel axis >= 2 tiles when M permits (free on v5e/v6e).
        if _round_up(M, tm_eff) // tm_eff < 2 and tm_eff >= 64:
            tm_eff = max(32, _round_up(tm_eff // 2, 32))

    Mp = _round_up(M, tm_eff)
    grid_m = Mp // tm_eff

    x2 = x.reshape(M, D_in).astype(w1.dtype)
    if Mp != M:
        x2 = jnp.pad(x2, ((0, Mp - M), (0, 0)))

    est = est_bytes(tm_eff, th_eff)
    vmem_limit = int(min(max(int(est * 1.25) + (4 << 20), 32 << 20), vmem_limit_cap))

    cost = pl.CostEstimate(
        flops=2 * Mp * (D_in * H + H * D_out_p),
        transcendentals=Mp * H,
        bytes_accessed=(Mp * D_in + D_in * H + H + H * D_out_p + D_out_p) * esz
                       + Mp * D_out_p * out_esz,
    )

    if not use_htile:
        kernel = functools.partial(_mlp_kernel, approximate=gelu_approximate)
        grid = (grid_m,)
        in_specs = [
            pl.BlockSpec((tm_eff, D_in), lambda i: (i, 0)),
            pl.BlockSpec((D_in, H), lambda i: (0, 0)),       # constant block index -> DMA'd once
            pl.BlockSpec((1, H), lambda i: (0, 0)),
            pl.BlockSpec((H, D_out_p), lambda i: (0, 0)),
            pl.BlockSpec((1, D_out_p), lambda i: (0, 0)),
        ]
        out_specs = pl.BlockSpec((tm_eff, D_out_p), lambda i: (i, 0))
        scratch_shapes = []
        dims = ("parallel",)
    else:
        kernel = functools.partial(_mlp_kernel_htiled, approximate=gelu_approximate)
        grid = (grid_m, H // th_eff)
        in_specs = [
            pl.BlockSpec((tm_eff, D_in), lambda i, k: (i, 0)),
            pl.BlockSpec((D_in, th_eff), lambda i, k: (0, k)),
            pl.BlockSpec((1, th_eff), lambda i, k: (0, k)),
            pl.BlockSpec((th_eff, D_out_p), lambda i, k: (k, 0)),
            pl.BlockSpec((1, D_out_p), lambda i, k: (0, 0)),
        ]
        out_specs = pl.BlockSpec((tm_eff, D_out_p), lambda i, k: (i, 0))
        scratch_shapes = [pltpu.VMEM((tm_eff, D_out_p), jnp.float32)]
        dims = ("parallel", "arbitrary")

    out = pl.pallas_call(
        kernel,
        out_shape=jax.ShapeDtypeStruct((Mp, D_out_p), out_dtype),
        grid_spec=pltpu.PrefetchScalarGridSpec(
            num_scalar_prefetch=0,
            grid=grid,
            in_specs=in_specs,
            out_specs=out_specs,
            scratch_shapes=scratch_shapes,
        ),
        compiler_params=pltpu.CompilerParams(
            dimension_semantics=dims,
            vmem_limit_bytes=vmem_limit,
        ),
        cost_estimate=cost,
    )(x2, w1, b1, w2, b2)

    out = out[:M, :D_out]
    return out.reshape(B, N, D_out)


def mlp(x, w1, b1, w2, b2, *, compute_dtype=jnp.bfloat16, **kwargs):
    """Convenience wrapper: prepares params then runs the kernel (prefer preparing once)."""
    return mlp_pallas(x, prepare_mlp_params(w1, b1, w2, b2, compute_dtype=compute_dtype), **kwargs)


def mlp_reference(x, w1, b1, w2, b2, *, approximate):
    h = x @ w1 + b1
    h = jax.nn.gelu(h, approximate=approximate)
    return h @ w2 + b2


def _make_params(key, d_in, d_hid, d_out):
    k_w1, k_b1, k_w2, k_b2 = jax.random.split(key, 4)
    lim1 = 1.0 / (d_in ** 0.5)
    w1 = jax.random.uniform(k_w1, (d_in, d_hid), jnp.float32, -lim1, lim1)
    b1 = jax.random.uniform(k_b1, (d_hid,), jnp.float32, -lim1, lim1)
    lim2 = 1.0 / (d_hid ** 0.5)
    w2 = jax.random.uniform(k_w2, (d_hid, d_out), jnp.float32, -lim2, lim2)
    b2 = jax.random.uniform(k_b2, (d_out,), jnp.float32, -lim2, lim2)
    return w1, b1, w2, b2


if __name__ == "__main__":
    key = jax.random.PRNGKey(0)
    B, N = 2, 8
    in_features, hidden_features, out_features = 32, 128, 32

    k_x, k_p1, k_p2 = jax.random.split(key, 3)
    x = jax.random.normal(k_x, (B, N, in_features), dtype=jnp.float32)
    w1, b1, w2, b2 = _make_params(k_p1, in_features, hidden_features, out_features)

    # Path 1: DEFAULT throughput path — bf16 operands, f32 accumulation, tanh GELU.
    params_bf16 = prepare_mlp_params(w1, b1, w2, b2, compute_dtype=jnp.bfloat16)
    y1 = mlp_pallas(x, params_bf16)
    jax.block_until_ready(y1)
    y1_ref = mlp_reference(x, w1, b1, w2, b2, approximate=True)
    assert jnp.allclose(y1, y1_ref, atol=3e-2, rtol=3e-2), "mismatch vs reference (bf16 default path)"

    # Path 2: f32 operands, exact erf GELU (matches torch.nn.GELU default numerics).
    params_f32 = prepare_mlp_params(w1, b1, w2, b2, compute_dtype=jnp.float32)
    y2 = mlp_pallas(x, params_f32, gelu_approximate=False)
    jax.block_until_ready(y2)
    y2_ref = mlp_reference(x, w1, b1, w2, b2, approximate=False)
    assert jnp.allclose(y2, y2_ref, atol=1e-5, rtol=1e-5), "mismatch vs reference (f32 exact path)"

    # Path 3: hidden-dimension-tiled accumulator path (v7x 64 MiB VMEM pattern), exercised explicitly.
    hidden2 = 256
    w1b, b1b, w2b, b2b = _make_params(k_p2, in_features, hidden2, out_features)
    params_h = prepare_mlp_params(w1b, b1b, w2b, b2b, compute_dtype=jnp.float32)
    y3 = mlp_pallas(x, params_h, th=128, gelu_approximate=False)
    jax.block_until_ready(y3)
    y3_ref = mlp_reference(x, w1b, b1b, w2b, b2b, approximate=False)
    assert jnp.allclose(y3, y3_ref, atol=1e-5, rtol=1e-5), "mismatch vs reference (H-tiled path)"

    print("KERNEL_OK")
</pallas_src>

<mosaic_0001>
module attributes {stable_mosaic.version = 11 : i64} {
  func.func @_mlp_kernel(%arg0: i32, %arg1: memref<32x32xbf16, #tpu.memory_space<vmem>>, %arg2: memref<32x128xbf16, #tpu.memory_space<vmem>>, %arg3: memref<1x128xbf16, #tpu.memory_space<vmem>>, %arg4: memref<128x128xbf16, #tpu.memory_space<vmem>>, %arg5: memref<1x128xbf16, #tpu.memory_space<vmem>>, %arg6: memref<32x128xf32, #tpu.memory_space<vmem>>) attributes {dimension_semantics = [#tpu.dimension_semantics<parallel>], iteration_bounds = array<i64: 1>, scalar_prefetch = 0 : i64, scratch_operands = 0 : i64, tpu.core_type = #tpu.core_type<tc>, window_params = [{transform_indices = @transform_0, window_bounds = array<i64: 32, 32>}, {pipeline_mode = #tpu.pipeline_mode<synchronous>, transform_indices = @transform_1, window_bounds = array<i64: 32, 128>}, {pipeline_mode = #tpu.pipeline_mode<synchronous>, transform_indices = @transform_2, window_bounds = array<i64: 1, 128>}, {pipeline_mode = #tpu.pipeline_mode<synchronous>, transform_indices = @transform_3, window_bounds = array<i64: 128, 128>}, {pipeline_mode = #tpu.pipeline_mode<synchronous>, transform_indices = @transform_4, window_bounds = array<i64: 1, 128>}, {transform_indices = @transform_5, window_bounds = array<i64: 32, 128>}]} {
    %c0 = arith.constant 0 : index
    %c0_0 = arith.constant 0 : index
    %0 = vector.load %arg1[%c0, %c0_0] : memref<32x32xbf16, #tpu.memory_space<vmem>>, vector<32x32xbf16>
    %c0_1 = arith.constant 0 : index
    %c0_2 = arith.constant 0 : index
    %1 = vector.load %arg2[%c0_1, %c0_2] : memref<32x128xbf16, #tpu.memory_space<vmem>>, vector<32x128xbf16>
    %cst = arith.constant dense<0.000000e+00> : vector<32x128xf32>
    %2 = tpu.matmul %0, %1, %cst {dimension_numbers = #tpu.dot_dimension_numbers<[1], [0], [0], [1], [0, 0, 1, 1], [], []>} : vector<32x32xbf16>, vector<32x128xbf16>, vector<32x128xf32> -> vector<32x128xf32>
    %3 = arith.truncf %2 : vector<32x128xf32> to vector<32x128xbf16>
    %c0_3 = arith.constant 0 : index
    %c0_4 = arith.constant 0 : index
    %4 = vector.load %arg3[%c0_3, %c0_4] : memref<1x128xbf16, #tpu.memory_space<vmem>>, vector<1x128xbf16>
    %5 = vector.broadcast %4 : vector<1x128xbf16> to vector<32x128xbf16>
    %6 = arith.addf %3, %5 : vector<32x128xbf16>
    %7 = arith.mulf %6, %6 : vector<32x128xbf16>
    %8 = arith.mulf %6, %7 : vector<32x128xbf16>
    %cst_5 = arith.constant 4.467770e-02 : bf16
    %9 = vector.broadcast %cst_5 : bf16 to vector<32x128xbf16>
    %10 = arith.mulf %9, %8 : vector<32x128xbf16>
    %11 = arith.addf %6, %10 : vector<32x128xbf16>
    %cst_6 = arith.constant 7.968750e-01 : bf16
    %12 = vector.broadcast %cst_6 : bf16 to vector<32x128xbf16>
    %13 = arith.mulf %12, %11 : vector<32x128xbf16>
    %14 = math.tanh %13 : vector<32x128xbf16>
    %cst_7 = arith.constant 1.000000e+00 : bf16
    %15 = vector.broadcast %cst_7 : bf16 to vector<32x128xbf16>
    %16 = arith.addf %15, %14 : vector<32x128xbf16>
    %cst_8 = arith.constant 5.000000e-01 : bf16
    %17 = vector.broadcast %cst_8 : bf16 to vector<32x128xbf16>
    %18 = arith.mulf %17, %16 : vector<32x128xbf16>
    %19 = arith.mulf %6, %18 : vector<32x128xbf16>
    %c0_9 = arith.constant 0 : index
    %c0_10 = arith.constant 0 : index
    %20 = vector.load %arg4[%c0_9, %c0_10] : memref<128x128xbf16, #tpu.memory_space<vmem>>, vector<128x128xbf16>
    %cst_11 = arith.constant dense<0.000000e+00> : vector<32x128xf32>
    %21 = tpu.matmul %19, %20, %cst_11 {dimension_numbers = #tpu.dot_dimension_numbers<[1], [0], [0], [1], [0, 0, 1, 1], [], []>} : vector<32x128xbf16>, vector<128x128xbf16>, vector<32x128xf32> -> vector<32x128xf32>
    %c0_12 = arith.constant 0 : index
    %c0_13 = arith.constant 0 : index
    %22 = vector.load %arg5[%c0_12, %c0_13] : memref<1x128xbf16, #tpu.memory_space<vmem>>, vector<1x128xbf16>
    %23 = arith.extf %22 : vector<1x128xbf16> to vector<1x128xf32>
    %24 = vector.broadcast %23 : vector<1x128xf32> to vector<32x128xf32>
    %25 = arith.addf %21, %24 : vector<32x128xf32>
    %c0_14 = arith.constant 0 : index
    %c0_15 = arith.constant 0 : index
    %26 = vector.load %arg6[%c0_14, %c0_15] : memref<32x128xf32, #tpu.memory_space<vmem>>, vector<32x128xf32>
    tpu.vector_store %arg6[%c0_14, %c0_15], %25 {strides = array<i32>} : memref<32x128xf32, #tpu.memory_space<vmem>>, vector<32x128xf32>,
    return
  }
  func.func @transform_0(%arg0: i32) -> (i32, i32) {
    %c0_i32 = arith.constant 0 : i32
    %c0_i32_0 = arith.constant 0 : i32
    return %arg0, %c0_i32 : i32, i32
  }
  func.func @transform_1(%arg0: i32) -> (i32, i32) {
    %c0_i32 = arith.constant 0 : i32
    %c0_i32_0 = arith.constant 0 : i32
    %c0_i32_1 = arith.constant 0 : i32
    return %c0_i32, %c0_i32_0 : i32, i32
  }
  func.func @transform_2(%arg0: i32) -> (i32, i32) {
    %c0_i32 = arith.constant 0 : i32
    %c0_i32_0 = arith.constant 0 : i32
    %c0_i32_1 = arith.constant 0 : i32
    return %c0_i32, %c0_i32_0 : i32, i32
  }
  func.func @transform_3(%arg0: i32) -> (i32, i32) {
    %c0_i32 = arith.constant 0 : i32
    %c0_i32_0 = arith.constant 0 : i32
    %c0_i32_1 = arith.constant 0 : i32
    return %c0_i32, %c0_i32_0 : i32, i32
  }
  func.func @transform_4(%arg0: i32) -> (i32, i32) {
    %c0_i32 = arith.constant 0 : i32
    %c0_i32_0 = arith.constant 0 : i32
    %c0_i32_1 = arith.constant 0 : i32
    return %c0_i32, %c0_i32_0 : i32, i32
  }
  func.func @transform_5(%arg0: i32) -> (i32, i32) {
    %c0_i32 = arith.constant 0 : i32
    %c0_i32_0 = arith.constant 0 : i32
    return %arg0, %c0_i32 : i32, i32
  }
}

</mosaic_0001>

<llo_original>
// kernel: tpu_custom_call.1
$region0: #{tpu_custom_call.1}
  #allocation0 [shape = 'u32[]', space=smem, size = 0x4, offset = 0x4, fixed_abs, tag = 'smem constant byte address 0x4 - core index']
  #allocation1 [shape = 'u32[144,128]{1,0:T(1,128)}', space=vmem, size = 0x12000, scoped, tag = 'internal scratch']
  %s0 = inlined_call_operand.hbm [shape: bf16[32,32], index: 0, kind: input, shape index: {}]
  %s1 = inlined_call_operand.hbm [shape: bf16[32,128], index: 1, kind: input, shape index: {}]
  %s2 = inlined_call_operand.vmem [shape: bf16[1,128], index: 2, kind: input, shape index: {}]
  %s3 = inlined_call_operand.hbm [shape: bf16[128,128], index: 3, kind: input, shape index: {}]
  %s4 = inlined_call_operand.vmem [shape: bf16[1,128], index: 4, kind: input, shape index: {}]
  %s5 = inlined_call_operand.hbm [shape: f32[32,128], index: 5, kind: output, shape index: {}]
  %s6 = sld [smem:[#allocation0]]
  $region42: #{tpu_custom_call.1} parent=0
    _
  %s8 = ssub.s32 1, %s6
  %s9 = scalar_select 0, %s8, %s6
  $region1: #{tpu_custom_call.1} parent=0
    #allocation2 [shape = 'u8[8192]{0}', space=vmem, size = 0x2000, scoped, tag = 'input window, operand 0, single buffered']
    #allocation3 [shape = 's32[1]{0}', space=sflag, size = 0x4, scoped, tag = 'scoped memory for tpu_custom_call.1']
    #allocation4 [shape = 's32[1]{0}', space=sflag, size = 0x4, scoped, tag = 'scoped memory for tpu_custom_call.1']
    #allocation5 [shape = 'u8[8192]{0}', space=vmem, size = 0x2000, scoped, tag = 'input window, operand 1, single buffered']
    #allocation6 [shape = 's32[1]{0}', space=sflag, size = 0x4, scoped, tag = 'scoped memory for tpu_custom_call.1']
    #allocation7 [shape = 'u8[32768]{0}', space=vmem, size = 0x8000, scoped, tag = 'input window, operand 3, single buffered']
    #allocation8 [shape = 'u8[16384]{0}', space=vmem, size = 0x4000, scoped, tag = 'output window, operand 0, single buffered']
    %10 = vsyncpa [#allocation3], 0
    %11 = vsyncpa [#allocation6], 0
    %12 = vsyncpa [#allocation4], 0
    // Predicated region
    $region2: #{tpu_custom_call.1} parent=1 // pred_check
      _
    $region3: #{tpu_custom_call.1} parent=1 // pred_check_branch
      %14 = sbr.rel (0) target = $region5
    $region4: #{tpu_custom_call.1} parent=1 // pred_region
      %s16 = ssub.s32 256, 256
      %17 = vsyncadd [#allocation3], %s16
      %s18 = sshll.u32 [#allocation2], 4
      %s19 = int_to_ptr.vmem [resolvable:$true] %s18
      %24 = dma.hbm_to_vmem [thread:$0]  %s0, 256, %s19, [#allocation3], 64, 64, 4
    $region5: #{tpu_custom_call.1} parent=1 // pred_fallthru
      _
    // Predicated region
    $region6: #{tpu_custom_call.1} parent=1 // pred_check
      _
    $region7: #{tpu_custom_call.1} parent=1 // pred_check_branch
      %26 = sbr.rel (0) target = $region9
    $region8: #{tpu_custom_call.1} parent=1 // pred_region
      %s28 = ssub.s32 256, 256
      %29 = vsyncadd [#allocation6], %s28
      %s30 = sshll.u32 [#allocation5], 4
      %s31 = int_to_ptr.vmem [resolvable:$true] %s30
      %36 = dma.hbm_to_vmem [thread:$0]  %s1, 256, %s31, [#allocation6], 64, 64, 4
    $region9: #{tpu_custom_call.1} parent=1 // pred_fallthru
      _
    // Predicated region
    $region10: #{tpu_custom_call.1} parent=1 // pred_check
      _
    $region11: #{tpu_custom_call.1} parent=1 // pred_check_branch
      %38 = sbr.rel (0) target = $region13
    $region12: #{tpu_custom_call.1} parent=1 // pred_region
      _
    $region13: #{tpu_custom_call.1} parent=1 // pred_fallthru
      _
    // Predicated region
    $region14: #{tpu_custom_call.1} parent=1 // pred_check
      _
    $region15: #{tpu_custom_call.1} parent=1 // pred_check_branch
      %40 = sbr.rel (0) target = $region17
    $region16: #{tpu_custom_call.1} parent=1 // pred_region
      %s42 = ssub.s32 1024, 1024
      %43 = vsyncadd [#allocation6], %s42
      %s44 = sshll.u32 [#allocation7], 4
      %s45 = int_to_ptr.vmem [resolvable:$true] %s44
      %50 = dma.hbm_to_vmem [thread:$0]  %s3, 1024, %s45, [#allocation6], 64, 64, 4
    $region17: #{tpu_custom_call.1} parent=1 // pred_fallthru
      _
    // Predicated region
    $region18: #{tpu_custom_call.1} parent=1 // pred_check
      _
    $region19: #{tpu_custom_call.1} parent=1 // pred_check_branch
      %52 = sbr.rel (0) target = $region21
    $region20: #{tpu_custom_call.1} parent=1 // pred_region
      _
    $region21: #{tpu_custom_call.1} parent=1 // pred_fallthru
      _
    // Predicated region
    $region22: #{tpu_custom_call.1} parent=1 // pred_check
      _
    $region23: #{tpu_custom_call.1} parent=1 // pred_check_branch
      %54 = sbr.rel (0) target = $region25
    $region24: #{tpu_custom_call.1} parent=1 // pred_region
      %55 = dma.done [#allocation3], 256
    $region25: #{tpu_custom_call.1} parent=1 // pred_fallthru
      _
    // Predicated region
    $region26: #{tpu_custom_call.1} parent=1 // pred_check
      _
    $region27: #{tpu_custom_call.1} parent=1 // pred_check_branch
      %57 = sbr.rel (0) target = $region29
    $region28: #{tpu_custom_call.1} parent=1 // pred_region
      %58 = dma.done [#allocation6], 256
    $region29: #{tpu_custom_call.1} parent=1 // pred_fallthru
      _
    // Predicated region
    $region30: #{tpu_custom_call.1} parent=1 // pred_check
      _
    $region31: #{tpu_custom_call.1} parent=1 // pred_check_branch
      %60 = sbr.rel (0) target = $region33
    $region32: #{tpu_custom_call.1} parent=1 // pred_region
      %61 = dma.done [#allocation6], 1024
    $region33: #{tpu_custom_call.1} parent=1 // pred_fallthru
      _
    %v67 = vld [vmem:[#allocation2] sm:$0xf]
    %v68 = vld [vmem:[#allocation2 + $0x4] sm:$0xf]
    %v69 = vld [vmem:[#allocation2 + $0x8] sm:$0xf]
    %v70 = vld [vmem:[#allocation2 + $0xc] sm:$0xf]
    %v71 = vld [vmem:[#allocation5] sm:$0xf]
    %v72 = vld [vmem:[#allocation5 + $0x4] sm:$0xf]
    %v73 = vld [vmem:[#allocation5 + $0x8] sm:$0xf]
    %v74 = vld [vmem:[#allocation5 + $0xc] sm:$0xf]
    %v79 = vunpack.c.l.b16 %v67
    %v80 = vunpack.c.l.b16 %v68
    %v81 = vunpack.c.l.b16 %v69
    %v82 = vunpack.c.l.b16 %v70
    %v83 = vpack.c.b16 %v80, %v79
    %v84 = vpack.c.b16 %v82, %v81
    %v89 = vunpack.c.l.b16 %v71
    %v90 = vunpack.c.l.b16 %v72
    %v91 = vunpack.c.l.b16 %v73
    %v92 = vunpack.c.l.b16 %v74
    %v93 = vpack.c.b16 %v90, %v89
    %v94 = vpack.c.b16 %v92, %v91
    %vm97 = vcmask 261120
    %v99 = vsel %vm97, %v83, 0
    %v102 = vsel %vm97, %v84, 0
    %104 = vmatprep.subr.bf16.mxu0 0
    %105 = vmatpush1.bf16.msra.mxu0 %v93
    %106 = vmatprep.subr.bf16.mxu0 0
    %107 = vmatpush1.bf16.msra.mxu0 %v94
    %108 = vmatprep.subr.bf16.mxu0 0
    %109 = vmatpush1.bf16.msra.mxu0 0
    %110 = vmatprep.subr.bf16.mxu0 0
    %111 = vmatpush1.bf16.msra.mxu0 0
    %112 = vmatprep.subr.bf16.mxu0 0
    %113 = vmatpush1.bf16.msra.mxu0 0
    %114 = vmatprep.subr.bf16.mxu0 0
    %115 = vmatpush1.bf16.msra.mxu0 0
    %116 = vmatprep.subr.bf16.mxu0 0
    %117 = vmatpush1.bf16.msra.mxu0 0
    %118 = vmatprep.subr.bf16.mxu0 0
    %119 = vmatpush1.bf16.msra.mxu0 0
    %120 = vmatprep.subr.bf16.mxu0 0
    %121 = vmatpush1.bf16.msra.mxu0 0
    %122 = vmatprep.subr.bf16.mxu0 0
    %123 = vmatpush1.bf16.msra.mxu0 0
    %124 = vmatprep.subr.bf16.mxu0 0
    %125 = vmatpush1.bf16.msra.mxu0 0
    %126 = vmatprep.subr.bf16.mxu0 0
    %127 = vmatpush1.bf16.msra.mxu0 0
    %128 = vmatprep.subr.bf16.mxu0 0
    %129 = vmatpush1.bf16.msra.mxu0 0
    %130 = vmatprep.subr.bf16.mxu0 0
    %131 = vmatpush1.bf16.msra.mxu0 0
    %132 = vmatprep.subr.bf16.mxu0 0
    %133 = vmatpush1.bf16.msra.mxu0 0
    %134 = vmatprep.subr.bf16.mxu0 0
    %135 = vmatpush1.bf16.msra.mxu0 0
    %136 = vmatprep.mubr.bf16.mxu0 0
    %137 = vmatmul.mubr.bf16.gmra.mrb[0].mxu0 %v99
    %v138 = vpop.f32.mrb[0].mxu0
    %v139 = vadd.f32 0.0, %v138
    %v140 = vpop.f32.mrb[0].mxu0
    %v141 = vpop.f32.mrb[0].mxu0
    %v142 = vadd.f32 0.0, %v141
    %v143 = vpop.f32.mrb[0].mxu0
    %144 = vmatprep.mubr.bf16.mxu0 0
    %145 = vmatmul.mubr.bf16.gmra.mrb[0].mxu0 %v102
    %v146 = vpop.f32.mrb[0].mxu0
    %v147 = vadd.f32 0.0, %v146
    %v148 = vpop.f32.mrb[0].mxu0
    %v149 = vpop.f32.mrb[0].mxu0
    %v150 = vadd.f32 0.0, %v149
    %v151 = vpop.f32.mrb[0].mxu0
    %152 = vdwg.mxu0
    %v153 = vpack.c.bf16 %v142, %v139
    %v154 = vpack.c.bf16 %v150, %v147
    %v155 = vld [vmem:[%s2] sm:$0x1]
    %v157 = vpack.i.b16 %v155, %v155
    %v159 = vlaneseq
    %v160 = vshrl.u32 %v159, 7
    %v161 = vsub.s32 0, %v160
    %v162 = vrot.slane %v157, %v161
    %v163 = vadd.bf16 %v153, %v162
    %v164 = vadd.bf16 %v154, %v162
    %v165 = vmul.bf16 %v163, %v163
    %v166 = vmul.bf16 %v164, %v164
    %v167 = vmul.bf16 %v163, %v165
    %v168 = vmul.bf16 %v164, %v166
    %v169 = vmul.bf16 %v167, 1027030327
    %v170 = vmul.bf16 %v168, 1027030327
    %v171 = vadd.bf16 %v163, %v169
    %v172 = vadd.bf16 %v164, %v170
    %v173 = vmul.bf16 %v171, 1061961548
    %v174 = vmul.bf16 %v172, 1061961548
    %v175 = vtanh.bf16.pop %v173
    %v176 = vtanh.bf16.pop %v174
    %v177 = vadd.bf16 %v175, 1065369472
    %v178 = vadd.bf16 %v176, 1065369472
    %v179 = vmul.bf16 %v177, 1056980736
    %v180 = vmul.bf16 %v178, 1056980736
    %v181 = vmul.bf16 %v163, %v179
    %v182 = vmul.bf16 %v164, %v180
    %v183 = vld [vmem:[#allocation7] sm:$0xf]
    %v184 = vld [vmem:[#allocation7 + $0x4] sm:$0xf]
    %v185 = vld [vmem:[#allocation7 + $0x8] sm:$0xf]
    %v186 = vld [vmem:[#allocation7 + $0xc] sm:$0xf]
    %v187 = vld [vmem:[#allocation7 + $0x10] sm:$0xf]
    %v188 = vld [vmem:[#allocation7 + $0x14] sm:$0xf]
    %v189 = vld [vmem:[#allocation7 + $0x18] sm:$0xf]
    %v190 = vld [vmem:[#allocation7 + $0x1c] sm:$0xf]
    %v191 = vld [vmem:[#allocation7 + $0x20] sm:$0xf]
    %v192 = vld [vmem:[#allocation7 + $0x24] sm:$0xf]
    %v193 = vld [vmem:[#allocation7 + $0x28] sm:$0xf]
    %v194 = vld [vmem:[#allocation7 + $0x2c] sm:$0xf]
    %v195 = vld [vmem:[#allocation7 + $0x30] sm:$0xf]
    %v196 = vld [vmem:[#allocation7 + $0x34] sm:$0xf]
    %v197 = vld [vmem:[#allocation7 + $0x38] sm:$0xf]
    %v198 = vld [vmem:[#allocation7 + $0x3c] sm:$0xf]
    %v199 = vld [vmem:[%s4] sm:$0x1]
    %v200 = vunpack.c.l.bf16 %v199
    %v201 = vlaneseq
    %v202 = vshrl.u32 %v201, 7
    %v203 = vsub.s32 0, %v202
    %v204 = vrot.slane %v200, %v203
    %v221 = vunpack.c.l.b16 %v183
    %v222 = vunpack.c.l.b16 %v184
    %v223 = vunpack.c.l.b16 %v185
    %v224 = vunpack.c.l.b16 %v186
    %v225 = vunpack.c.l.b16 %v187
    %v226 = vunpack.c.l.b16 %v188
    %v227 = vunpack.c.l.b16 %v189
    %v228 = vunpack.c.l.b16 %v190
    %v229 = vunpack.c.l.b16 %v191
    %v230 = vunpack.c.l.b16 %v192
    %v231 = vunpack.c.l.b16 %v193
    %v232 = vunpack.c.l.b16 %v194
    %v233 = vunpack.c.l.b16 %v195
    %v234 = vunpack.c.l.b16 %v196
    %v235 = vunpack.c.l.b16 %v197
    %v236 = vunpack.c.l.b16 %v198
    %v237 = vpack.c.b16 %v222, %v221
    %v238 = vpack.c.b16 %v224, %v223
    %v239 = vpack.c.b16 %v226, %v225
    %v240 = vpack.c.b16 %v228, %v227
    %v241 = vpack.c.b16 %v230, %v229
    %v242 = vpack.c.b16 %v232, %v231
    %v243 = vpack.c.b16 %v234, %v233
    %v244 = vpack.c.b16 %v236, %v235
    %253 = vmatprep.subr.bf16.mxu0 0
    %254 = vmatpush1.bf16.msra.mxu0 %v237
    %255 = vmatprep.subr.bf16.mxu0 0
    %256 = vmatpush1.bf16.msra.mxu0 %v238
    %257 = vmatprep.subr.bf16.mxu0 0
    %258 = vmatpush1.bf16.msra.mxu0 %v239
    %259 = vmatprep.subr.bf16.mxu0 0
    %260 = vmatpush1.bf16.msra.mxu0 %v240
    %261 = vmatprep.subr.bf16.mxu0 0
    %262 = vmatpush1.bf16.msra.mxu0 %v241
    %263 = vmatprep.subr.bf16.mxu0 0
    %264 = vmatpush1.bf16.msra.mxu0 %v242
    %265 = vmatprep.subr.bf16.mxu0 0
    %266 = vmatpush1.bf16.msra.mxu0 %v243
    %267 = vmatprep.subr.bf16.mxu0 0
    %268 = vmatpush1.bf16.msra.mxu0 %v244
    %269 = vmatprep.subr.bf16.mxu0 0
    %270 = vmatpush1.bf16.msra.mxu0 0
    %271 = vmatprep.subr.bf16.mxu0 0
    %272 = vmatpush1.bf16.msra.mxu0 0
    %273 = vmatprep.subr.bf16.mxu0 0
    %274 = vmatpush1.bf16.msra.mxu0 0
    %275 = vmatprep.subr.bf16.mxu0 0
    %276 = vmatpush1.bf16.msra.mxu0 0
    %277 = vmatprep.subr.bf16.mxu0 0
    %278 = vmatpush1.bf16.msra.mxu0 0
    %279 = vmatprep.subr.bf16.mxu0 0
    %280 = vmatpush1.bf16.msra.mxu0 0
    %281 = vmatprep.subr.bf16.mxu0 0
    %282 = vmatpush1.bf16.msra.mxu0 0
    %283 = vmatprep.subr.bf16.mxu0 0
    %284 = vmatpush1.bf16.msra.mxu0 0
    %285 = vmatprep.mubr.bf16.mxu0 0
    %286 = vmatmul.mubr.bf16.gmra.mrb[0].mxu0 %v181
    %v287 = vpop.f32.mrb[0].mxu0
    %v288 = vadd.f32 %v204, %v287
    %v289 = vpop.f32.mrb[0].mxu0
    %v290 = vpop.f32.mrb[0].mxu0
    %v291 = vadd.f32 %v204, %v290
    %v292 = vpop.f32.mrb[0].mxu0
    %293 = vmatprep.mubr.bf16.mxu0 0
    %294 = vmatmul.mubr.bf16.gmra.mrb[0].mxu0 %v182
    %v295 = vpop.f32.mrb[0].mxu0
    %v296 = vadd.f32 %v204, %v295
    %v297 = vpop.f32.mrb[0].mxu0
    %v298 = vpop.f32.mrb[0].mxu0
    %v299 = vadd.f32 %v204, %v298
    %v300 = vpop.f32.mrb[0].mxu0
    %301 = vdwg.mxu0
    %302 = vst [vmem:[#allocation8] sm:$0xff] %v288
    %303 = vst [vmem:[#allocation8 + $0x8] sm:$0xff] %v291
    %304 = vst [vmem:[#allocation8 + $0x10] sm:$0xff] %v296
    %305 = vst [vmem:[#allocation8 + $0x18] sm:$0xff] %v299
    // Predicated region
    $region34: #{tpu_custom_call.1} parent=1 // pred_check
      _
    $region35: #{tpu_custom_call.1} parent=1 // pred_check_branch
      %307 = sbr.rel (0) target = $region37
    $region36: #{tpu_custom_call.1} parent=1 // pred_region
      %s309 = ssub.s32 512, 512
      %310 = vsyncadd [#allocation4], %s309
      %s311 = sshll.u32 [#allocation8], 4
      %s312 = int_to_ptr.vmem [resolvable:$true] %s311
      %317 = dma.vmem_to_hbm [thread:$0]  %s312, 512, %s5, [#allocation4], 128, 128, 8
    $region37: #{tpu_custom_call.1} parent=1 // pred_fallthru
      _
    // Predicated region
    $region38: #{tpu_custom_call.1} parent=1 // pred_check
      _
    $region39: #{tpu_custom_call.1} parent=1 // pred_check_branch
      %319 = sbr.rel (0) target = $region41
    $region40: #{tpu_custom_call.1} parent=1 // pred_region
      %320 = dma.done [#allocation4], 512
    $region41: #{tpu_custom_call.1} parent=1 // pred_fallthru
      _
    %321 = vsyncpa [#allocation3], 1
    %322 = vsyncpa [#allocation6], 1
    %323 = vsyncpa [#allocation4], 1

</llo_original>
